<compile_context>
chip_gen: v6e
topology: v6e:2x2x1
jax: 0.10.0
libtpu: 0.0.40
codegen_flags: <defaults>
</compile_context>

<pallas_src>
import functools

import jax
import jax.numpy as jnp
from jax.experimental import pallas as pl
from jax.experimental.pallas import tpu as pltpu
from jax.scipy.linalg import block_diag


def _vmem():
    return pl.BlockSpec(memory_space=pltpu.MemorySpace.VMEM)


def _elu(x):
    return jnp.where(x > 0.0, x, jnp.exp(jnp.minimum(x, 0.0)) - 1.0)


# ----------------------------------------------------------------------------- kernels ---

def _embed_kernel(h_ref, e_ref, wh_ref, bh_ref, we_ref, be_ref, h_out_ref, e_out_ref):
    # embedding_h and embedding_e fused into one launch (two outputs).
    h_out_ref[...] = (jnp.dot(h_ref[...], wh_ref[...], preferred_element_type=jnp.float32)
                      + bh_ref[...])
    e_out_ref[...] = (jnp.dot(e_ref[...], we_ref[...], preferred_element_type=jnp.float32)
                      + be_ref[...])


def embed(p, h_raw, e_raw):
    n_nodes, n_edges = h_raw.shape[0], e_raw.shape[0]
    hd = p["w_h"].shape[1]
    return pl.pallas_call(
        _embed_kernel,
        out_shape=(jax.ShapeDtypeStruct((n_nodes, hd), jnp.float32),
                   jax.ShapeDtypeStruct((n_edges, hd), jnp.float32)),
        in_specs=[_vmem()] * 6,
        out_specs=(_vmem(), _vmem()),
    )(h_raw, e_raw, p["w_h"], p["b_h"], p["w_e"], p["b_e"])


def _gat_layer_kernel(h_ref, e_ref, src_oh_ref, dst_oh_ref, dst_mask_ref,
                      w_h_ref, w_e_ref, w_pe_ref, w_ps_ref, w_pd_ref,
                      b_pa_ref, bn_h_ref, rep_ref,
                      h_out_ref, e_out_ref, *, n_heads, out_dim, residual):
    HD = n_heads * out_dim
    h_in = h_ref[...]                                                              # (N, F)
    e_in = e_ref[...]                                                              # (E, F)

    # fc_h / fc_e, all heads fused along the output-feature axis.
    z_h = jnp.dot(h_in, w_h_ref[...], preferred_element_type=jnp.float32)          # (N, HD)
    z_e = jnp.dot(e_in, w_e_ref[...], preferred_element_type=jnp.float32)          # (E, HD)

    # Per-edge src / dst gathers via bf16 one-hot MXU matmuls (one-hot is exact in bf16).
    z_h_b = z_h.astype(jnp.bfloat16)
    z_src = jnp.dot(src_oh_ref[...], z_h_b, preferred_element_type=jnp.float32)    # (E, HD)
    z_dst = jnp.dot(dst_oh_ref[...], z_h_b, preferred_element_type=jnp.float32)    # (E, HD)

    # fc_proj and attn_fc fused: weights are block-diagonal per head, attn_fc occupies the
    # last H output columns.  BN_e scale/shift already folded into w_proj / b_proj.
    pa = (jnp.dot(z_e, w_pe_ref[...], preferred_element_type=jnp.float32)
          + jnp.dot(z_src, w_ps_ref[...], preferred_element_type=jnp.float32)
          + jnp.dot(z_dst, w_pd_ref[...], preferred_element_type=jnp.float32)
          + b_pa_ref[...])                                                          # (E, HD+H)
    e_proj = pa[:, 0:HD]                                                            # (E, HD)
    attn = pa[:, HD:HD + n_heads]                                                   # (E, H)
    attn = jnp.where(attn >= 0.0, attn, 0.01 * attn)   # LeakyReLU (torch default slope)

    # Edge-side softmax: subtract a per-head global max (shift-invariant per destination),
    # exp over (E, H) only; per-destination denom + aggregation are MXU matmuls.
    m = jnp.max(attn, axis=0, keepdims=True)                                        # (1, H)
    p = jnp.exp(attn - m)                                                           # (E, H)
    mask = dst_mask_ref[...]                                                        # (N, E) bf16
    denom = jnp.dot(mask, p.astype(jnp.bfloat16),
                    preferred_element_type=jnp.float32)                             # (N, H)
    p_exp = jnp.dot(p, rep_ref[...], preferred_element_type=jnp.float32)            # (E, HD)
    weighted = (p_exp * z_src).astype(jnp.bfloat16)                                 # (E, HD)
    h_agg = jnp.dot(mask, weighted, preferred_element_type=jnp.float32)             # (N, HD)
    denom_exp = jnp.dot(denom, rep_ref[...], preferred_element_type=jnp.float32)    # (N, HD)
    # Zero in-degree nodes aggregate to 0 (matches DGL edge_softmax behavior).
    inv = jnp.where(denom_exp > 0.0, pl.reciprocal(denom_exp, approx=True), 0.0)
    h_agg = h_agg * inv

    # eval-mode BatchNorm on the node path (scale / shift rows), then ELU; residual fused.
    bn_h = bn_h_ref[...]                                                            # (2, HD)
    h_act = _elu(h_agg * bn_h[0:1, :] + bn_h[1:2, :])
    e_act = _elu(e_proj)
    if residual:
        h_act = h_in + h_act
        e_act = e_in + e_act
    h_out_ref[...] = h_act
    e_out_ref[...] = e_act


def gat_layer(p, h, e, src_oh, dst_oh, dst_mask):
    n_nodes, n_edges = h.shape[0], e.shape[0]
    HD = p["w_h"].shape[1]
    kern = functools.partial(_gat_layer_kernel, n_heads=p["n_heads"],
                             out_dim=p["out_dim"], residual=p["residual"])
    return pl.pallas_call(
        kern,
        out_shape=(jax.ShapeDtypeStruct((n_nodes, HD), jnp.float32),
                   jax.ShapeDtypeStruct((n_edges, HD), jnp.float32)),
        in_specs=[_vmem()] * 13,
        out_specs=(_vmem(), _vmem()),
    )(h, e, src_oh, dst_oh, dst_mask,
      p["w_h"], p["w_e"], p["w_pe"], p["w_ps"], p["w_pd"],
      p["b_pa"], p["bn_h"], p["rep"])


def _edge_mlp_kernel(h_ref, e_ref, src_oh_ref, dst_oh_ref,
                     w1s_ref, w1d_ref, w1e_ref, b1_ref, w2_ref, b2_ref, w3_ref, b3_ref,
                     o_ref):
    h = h_ref[...].astype(jnp.bfloat16)
    h_src = jnp.dot(src_oh_ref[...], h, preferred_element_type=jnp.float32)        # (E, D)
    h_dst = jnp.dot(dst_oh_ref[...], h, preferred_element_type=jnp.float32)        # (E, D)
    # MLPReadout layer 0 on concat([h_src, h_dst, e]) -- pre-split weight sum.
    y = (jnp.dot(h_src, w1s_ref[...], preferred_element_type=jnp.float32)
         + jnp.dot(h_dst, w1d_ref[...], preferred_element_type=jnp.float32)
         + jnp.dot(e_ref[...], w1e_ref[...], preferred_element_type=jnp.float32)
         + b1_ref[...])
    y = jnp.maximum(y, 0.0)
    y = jnp.maximum(jnp.dot(y, w2_ref[...], preferred_element_type=jnp.float32) + b2_ref[...],
                    0.0)
    # Final layer is padded to a lane-dense 128-wide output; sliced outside the kernel.
    o_ref[...] = jnp.dot(y, w3_ref[...], preferred_element_type=jnp.float32) + b3_ref[...]


def edge_mlp(p, h, e, src_oh, dst_oh):
    n_edges = e.shape[0]
    pad = p["w3"].shape[1]
    out = pl.pallas_call(
        _edge_mlp_kernel,
        out_shape=jax.ShapeDtypeStruct((n_edges, pad), jnp.float32),
        in_specs=[_vmem()] * 12,
        out_specs=_vmem(),
    )(h, e, src_oh, dst_oh,
      p["w1s"], p["w1d"], p["w1e"], p["b1"], p["w2"], p["b2"], p["w3"], p["b3"])
    return out[:, :p["n_classes"]]


# ----------------------------------------------------------------------- params / model ---

def _linear_params(key, fan_in, fan_out, bias=True):
    kw, kb = jax.random.split(key)
    bound = 1.0 / float(fan_in) ** 0.5
    w = jax.random.uniform(kw, (fan_in, fan_out), jnp.float32, -bound, bound)
    if bias:
        b = jax.random.uniform(kb, (1, fan_out), jnp.float32, -bound, bound)
    else:
        b = jnp.zeros((1, fan_out), jnp.float32)
    return w, b


def _bn_eval_params(dim):
    # running_mean=0, running_var=1, gamma=1, beta=0, eps=1e-5 -> scale / shift rows.
    scale = jnp.full((1, dim), 1.0 / (1.0 + 1e-5) ** 0.5, jnp.float32)
    shift = jnp.zeros((1, dim), jnp.float32)
    return jnp.concatenate([scale, shift], axis=0)


def build_params(key, in_dim, in_dim_edge, hidden_dim, out_dim, n_heads, n_classes, n_layers):
    keys = iter(jax.random.split(key, 128))
    params = {}
    w_eh, b_eh = _linear_params(next(keys), in_dim, hidden_dim * n_heads)
    w_ee, b_ee = _linear_params(next(keys), in_dim_edge, hidden_dim * n_heads)
    params["embed"] = dict(w_h=w_eh, b_h=b_eh, w_e=w_ee, b_e=b_ee)

    layer_dims = [(hidden_dim * n_heads, hidden_dim, n_heads)] * (n_layers - 1)
    layer_dims.append((hidden_dim * n_heads, out_dim, 1))
    layers = []
    for fin, fout, nh in layer_dims:
        heads = []
        for _ in range(nh):
            w_h, _ = _linear_params(next(keys), fin, fout, bias=False)
            w_e, _ = _linear_params(next(keys), fin, fout, bias=False)
            w_proj, b_proj = _linear_params(next(keys), 3 * fout, fout)
            w_attn, _ = _linear_params(next(keys), 3 * fout, 1, bias=False)
            heads.append(dict(w_h=w_h, w_e=w_e, w_proj=w_proj, b_proj=b_proj,
                              w_attn=w_attn, bn_h=_bn_eval_params(fout),
                              bn_e=_bn_eval_params(fout)))
        layers.append(_prep_layer(heads, residual=(fin == fout * nh)))
    params["layers"] = layers

    mlp_in = 3 * out_dim
    w1, b1 = _linear_params(next(keys), mlp_in, mlp_in // 2)
    w2, b2 = _linear_params(next(keys), mlp_in // 2, mlp_in // 4)
    w3, b3 = _linear_params(next(keys), mlp_in // 4, n_classes)
    params["mlp"] = _prep_mlp(w1, b1, w2, b2, w3, b3, out_dim, n_classes)
    return params


def _prep_layer(heads, residual):
    """Fuse per-head parameters into a single layer kernel's operands."""
    D = heads[0]["w_h"].shape[1]
    H = len(heads)
    w_h = jnp.concatenate([hd["w_h"] for hd in heads], axis=1)      # (F, H*D)
    w_e = jnp.concatenate([hd["w_e"] for hd in heads], axis=1)      # (F, H*D)
    pe, ps, pd, ae, as_, ad, b_parts, bn_h_parts = [], [], [], [], [], [], [], []
    for hd in heads:
        scale_e, shift_e = hd["bn_e"][0:1, :], hd["bn_e"][1:2, :]
        w_proj = hd["w_proj"] * scale_e          # fold eval-mode BN_e into fc_proj
        b_proj = hd["b_proj"] * scale_e + shift_e
        pe.append(w_proj[0:D]); ps.append(w_proj[D:2 * D]); pd.append(w_proj[2 * D:3 * D])
        wa = hd["w_attn"]
        ae.append(wa[0:D]); as_.append(wa[D:2 * D]); ad.append(wa[2 * D:3 * D])
        b_parts.append(b_proj)
        bn_h_parts.append(hd["bn_h"])
    # block-diagonal per-head proj weights, attn weights appended as the last H columns.
    w_pe = jnp.concatenate([block_diag(*pe), block_diag(*ae)], axis=1)   # (H*D, H*D+H)
    w_ps = jnp.concatenate([block_diag(*ps), block_diag(*as_)], axis=1)
    w_pd = jnp.concatenate([block_diag(*pd), block_diag(*ad)], axis=1)
    b_pa = jnp.concatenate(b_parts + [jnp.zeros((1, H), jnp.float32)], axis=1)
    bn_h = jnp.concatenate(bn_h_parts, axis=1)                            # (2, H*D)
    rep = jnp.repeat(jnp.eye(H, dtype=jnp.float32), D, axis=1)            # (H, H*D)
    return dict(w_h=w_h, w_e=w_e, w_pe=w_pe, w_ps=w_ps, w_pd=w_pd,
                b_pa=b_pa, bn_h=bn_h, rep=rep,
                n_heads=H, out_dim=D, residual=residual)


def _prep_mlp(w1, b1, w2, b2, w3, b3, out_dim, n_classes, pad_to=128):
    D = out_dim
    w3p = jnp.zeros((w3.shape[0], pad_to), jnp.float32).at[:, :n_classes].set(w3)
    b3p = jnp.zeros((1, pad_to), jnp.float32).at[:, :n_classes].set(b3)
    return dict(w1s=w1[0:D], w1d=w1[D:2 * D], w1e=w1[2 * D:3 * D], b1=b1,
                w2=w2, b2=b2, w3=w3p, b3=b3p, n_classes=n_classes)


def gatnet_forward(params, h_raw, e_raw, src_oh, dst_oh, dst_mask):
    # embedding_e / embedding_h (edge_feat=True so e is used as-is); in_feat_dropout = id.
    h, e = embed(params["embed"], h_raw, e_raw)
    for layer in params["layers"]:
        h, e = gat_layer(layer, h, e, src_oh, dst_oh, dst_mask)
    # apply_edges: cat([h[src], h[dst]]), then cat with e, then MLPReadout.
    return edge_mlp(params["mlp"], h, e, src_oh, dst_oh)


# --------------------------------------------------------------------------------- main ---

if __name__ == "__main__":
    # net_params (small, consistent with the module)
    in_dim, in_dim_edge = 16, 2
    hidden_dim, out_dim = 16, 16
    n_heads, n_classes, n_layers = 2, 2, 3

    # small deterministic graph: N nodes, every node has in-degree 2
    N = 12
    src_idx, dst_idx = [], []
    for i in range(N):
        src_idx += [i, i]
        dst_idx += [(i + 1) % N, (i + 2) % N]
    E = len(src_idx)
    src = jnp.asarray(src_idx, jnp.int32)
    dst = jnp.asarray(dst_idx, jnp.int32)
    # one-hot gather / incidence matrices in bf16 (values exactly 0/1 -> exact in bf16)
    src_oh = jax.nn.one_hot(src, N, dtype=jnp.bfloat16)          # (E, N)
    dst_oh = jax.nn.one_hot(dst, N, dtype=jnp.bfloat16)          # (E, N)
    dst_mask = jnp.transpose(dst_oh)                             # (N, E)

    key = jax.random.PRNGKey(0)
    k_param, k_h, k_e = jax.random.split(key, 3)
    params = build_params(k_param, in_dim, in_dim_edge, hidden_dim, out_dim,
                          n_heads, n_classes, n_layers)
    h_raw = jax.random.normal(k_h, (N, in_dim), jnp.float32)
    e_raw = jax.random.normal(k_e, (E, in_dim_edge), jnp.float32)

    out = gatnet_forward(params, h_raw, e_raw, src_oh, dst_oh, dst_mask)
    out = jax.block_until_ready(out)

    assert out.shape == (E, n_classes), out.shape
    assert bool(jnp.all(jnp.isfinite(out)))
    print("KERNEL_OK")
</pallas_src>

<mosaic_0001>
module attributes {stable_mosaic.version = 11 : i64} {
  func.func @_embed_kernel(%arg0: memref<12x16xf32, #tpu.memory_space<vmem>>, %arg1: memref<24x2xf32, #tpu.memory_space<vmem>>, %arg2: memref<16x32xf32, #tpu.memory_space<vmem>>, %arg3: memref<1x32xf32, #tpu.memory_space<vmem>>, %arg4: memref<2x32xf32, #tpu.memory_space<vmem>>, %arg5: memref<1x32xf32, #tpu.memory_space<vmem>>, %arg6: memref<12x32xf32, #tpu.memory_space<vmem>>, %arg7: memref<24x32xf32, #tpu.memory_space<vmem>>) attributes {dimension_semantics = [], scalar_prefetch = 0 : i64, scratch_operands = 0 : i64, tpu.core_type = #tpu.core_type<tc>} {
    %c0 = arith.constant 0 : index
    %c0_0 = arith.constant 0 : index
    %0 = vector.load %arg0[%c0, %c0_0] : memref<12x16xf32, #tpu.memory_space<vmem>>, vector<12x16xf32>
    %c0_1 = arith.constant 0 : index
    %c0_2 = arith.constant 0 : index
    %1 = vector.load %arg2[%c0_1, %c0_2] : memref<16x32xf32, #tpu.memory_space<vmem>>, vector<16x32xf32>
    %cst = arith.constant dense<0.000000e+00> : vector<12x32xf32>
    %2 = tpu.matmul %0, %1, %cst {dimension_numbers = #tpu.dot_dimension_numbers<[1], [0], [0], [1], [0, 0, 1, 1], [], []>} : vector<12x16xf32>, vector<16x32xf32>, vector<12x32xf32> -> vector<12x32xf32>
    %c0_3 = arith.constant 0 : index
    %c0_4 = arith.constant 0 : index
    %3 = vector.load %arg3[%c0_3, %c0_4] : memref<1x32xf32, #tpu.memory_space<vmem>>, vector<1x32xf32>
    %4 = vector.broadcast %3 : vector<1x32xf32> to vector<12x32xf32>
    %5 = arith.addf %2, %4 : vector<12x32xf32>
    %c0_5 = arith.constant 0 : index
    %c0_6 = arith.constant 0 : index
    %6 = vector.load %arg6[%c0_5, %c0_6] : memref<12x32xf32, #tpu.memory_space<vmem>>, vector<12x32xf32>
    tpu.vector_store %arg6[%c0_5, %c0_6], %5 {strides = array<i32>} : memref<12x32xf32, #tpu.memory_space<vmem>>, vector<12x32xf32>,
    %c0_7 = arith.constant 0 : index
    %c0_8 = arith.constant 0 : index
    %7 = vector.load %arg1[%c0_7, %c0_8] : memref<24x2xf32, #tpu.memory_space<vmem>>, vector<24x2xf32>
    %c0_9 = arith.constant 0 : index
    %c0_10 = arith.constant 0 : index
    %8 = vector.load %arg4[%c0_9, %c0_10] : memref<2x32xf32, #tpu.memory_space<vmem>>, vector<2x32xf32>
    %cst_11 = arith.constant dense<0.000000e+00> : vector<24x32xf32>
    %9 = tpu.matmul %7, %8, %cst_11 {dimension_numbers = #tpu.dot_dimension_numbers<[1], [0], [0], [1], [0, 0, 1, 1], [], []>} : vector<24x2xf32>, vector<2x32xf32>, vector<24x32xf32> -> vector<24x32xf32>
    %c0_12 = arith.constant 0 : index
    %c0_13 = arith.constant 0 : index
    %10 = vector.load %arg5[%c0_12, %c0_13] : memref<1x32xf32, #tpu.memory_space<vmem>>, vector<1x32xf32>
    %11 = vector.broadcast %10 : vector<1x32xf32> to vector<24x32xf32>
    %12 = arith.addf %9, %11 : vector<24x32xf32>
    %c0_14 = arith.constant 0 : index
    %c0_15 = arith.constant 0 : index
    %13 = vector.load %arg7[%c0_14, %c0_15] : memref<24x32xf32, #tpu.memory_space<vmem>>, vector<24x32xf32>
    tpu.vector_store %arg7[%c0_14, %c0_15], %12 {strides = array<i32>} : memref<24x32xf32, #tpu.memory_space<vmem>>, vector<24x32xf32>,
    return
  }
}

</mosaic_0001>

<llo_original>
// kernel: tpu_custom_call.1
$region0: #{tpu_custom_call.1}
  #allocation0 [shape = 'u32[]', space=smem, size = 0x4, offset = 0x4, fixed_abs, tag = 'smem constant byte address 0x4 - core index']
  #allocation1 [shape = 'u32[144,128]{1,0:T(1,128)}', space=vmem, size = 0x12000, scoped, tag = 'internal scratch']
  %s0 = inlined_call_operand.vmem [shape: f32[12,16], index: 0, kind: input, shape index: {}]
  %s1 = inlined_call_operand.vmem [shape: f32[24,2], index: 1, kind: input, shape index: {}]
  %s2 = inlined_call_operand.hbm [shape: f32[16,32], index: 2, kind: input, shape index: {}]
  %s3 = inlined_call_operand.vmem [shape: f32[1,32], index: 3, kind: input, shape index: {}]
  %s4 = inlined_call_operand.vmem [shape: f32[2,32], index: 4, kind: input, shape index: {}]
  %s5 = inlined_call_operand.vmem [shape: f32[1,32], index: 5, kind: input, shape index: {}]
  %s6 = inlined_call_operand.hbm [shape: f32[12,32], index: 6, kind: output, shape index: {0}]
  %s7 = inlined_call_operand.hbm [shape: f32[24,32], index: 7, kind: output, shape index: {1}]
  %8 = xla_tuple %s6, %s7
  %s9 = sld [smem:[#allocation0]]
  $region46: #{tpu_custom_call.1} parent=0
    _
  %s11 = ssub.s32 1, %s9
  %s12 = scalar_select 0, %s11, %s9
  $region1: #{tpu_custom_call.1} parent=0
    #allocation2 [shape = 'u8[8192]{0}', space=vmem, size = 0x2000, scoped, tag = 'input window, operand 2, single buffered']
    #allocation3 [shape = 's32[1]{0}', space=sflag, size = 0x4, scoped, tag = 'scoped memory for tpu_custom_call.1']
    #allocation4 [shape = 's32[1]{0}', space=sflag, size = 0x4, scoped, tag = 'scoped memory for tpu_custom_call.1']
    #allocation5 [shape = 'u8[8192]{0}', space=vmem, size = 0x2000, scoped, tag = 'output window, operand 0, single buffered']
    #allocation6 [shape = 'u8[12288]{0}', space=vmem, size = 0x3000, scoped, tag = 'output window, operand 1, single buffered']
    #allocation7 [shape = 's32[1]{0}', space=sflag, size = 0x4, scoped, tag = 'scoped memory for tpu_custom_call.1']
    %13 = vsyncpa [#allocation3], 0
    %14 = vsyncpa [#allocation4], 0
    %15 = vsyncpa [#allocation7], 0
    // Predicated region
    $region2: #{tpu_custom_call.1} parent=1 // pred_check
      _
    $region3: #{tpu_custom_call.1} parent=1 // pred_check_branch
      %17 = sbr.rel (0) target = $region5
    $region4: #{tpu_custom_call.1} parent=1 // pred_region
      _
    $region5: #{tpu_custom_call.1} parent=1 // pred_fallthru
      _
    // Predicated region
    $region6: #{tpu_custom_call.1} parent=1 // pred_check
      _
    $region7: #{tpu_custom_call.1} parent=1 // pred_check_branch
      %19 = sbr.rel (0) target = $region9
    $region8: #{tpu_custom_call.1} parent=1 // pred_region
      _
    $region9: #{tpu_custom_call.1} parent=1 // pred_fallthru
      _
    // Predicated region
    $region10: #{tpu_custom_call.1} parent=1 // pred_check
      _
    $region11: #{tpu_custom_call.1} parent=1 // pred_check_branch
      %21 = sbr.rel (0) target = $region13
    $region12: #{tpu_custom_call.1} parent=1 // pred_region
      %s23 = ssub.s32 256, 256
      %24 = vsyncadd [#allocation3], %s23
      %s25 = sshll.u32 [#allocation2], 4
      %s26 = int_to_ptr.vmem [resolvable:$true] %s25
      %31 = dma.hbm_to_vmem [thread:$0]  %s2, 256, %s26, [#allocation3], 128, 128, 8
    $region13: #{tpu_custom_call.1} parent=1 // pred_fallthru
      _
    // Predicated region
    $region14: #{tpu_custom_call.1} parent=1 // pred_check
      _
    $region15: #{tpu_custom_call.1} parent=1 // pred_check_branch
      %33 = sbr.rel (0) target = $region17
    $region16: #{tpu_custom_call.1} parent=1 // pred_region
      _
    $region17: #{tpu_custom_call.1} parent=1 // pred_fallthru
      _
    // Predicated region
    $region18: #{tpu_custom_call.1} parent=1 // pred_check
      _
    $region19: #{tpu_custom_call.1} parent=1 // pred_check_branch
      %35 = sbr.rel (0) target = $region21
    $region20: #{tpu_custom_call.1} parent=1 // pred_region
      _
    $region21: #{tpu_custom_call.1} parent=1 // pred_fallthru
      _
    // Predicated region
    $region22: #{tpu_custom_call.1} parent=1 // pred_check
      _
    $region23: #{tpu_custom_call.1} parent=1 // pred_check_branch
      %37 = sbr.rel (0) target = $region25
    $region24: #{tpu_custom_call.1} parent=1 // pred_region
      _
    $region25: #{tpu_custom_call.1} parent=1 // pred_fallthru
      _
    // Predicated region
    $region26: #{tpu_custom_call.1} parent=1 // pred_check
      _
    $region27: #{tpu_custom_call.1} parent=1 // pred_check_branch
      %39 = sbr.rel (0) target = $region29
    $region28: #{tpu_custom_call.1} parent=1 // pred_region
      %40 = dma.done [#allocation3], 256
    $region29: #{tpu_custom_call.1} parent=1 // pred_fallthru
      _
    %v41 = vld [vmem:[%s0] sm:$0xff]
    %v42 = vld [vmem:[%s0 + $0x8] sm:$0xf]
    %v43 = vld [vmem:[#allocation2] sm:$0xff]
    %v44 = vld [vmem:[#allocation2 + $0x8] sm:$0xff]
    %v45 = vld [vmem:[%s3] sm:$0x1]
    %v47 = vlaneseq
    %v48 = vshrl.u32 %v47, 7
    %v49 = vsub.s32 0, %v48
    %v50 = vrot.slane %v45, %v49
    %vm52 = vcmask 130048
    %v54 = vsel %vm52, %v41, 0
    %v57 = vsel %vm52, %v42, 0
    %59 = vmatprep.subr.mxu0 0.0
    %60 = vmatpush1.msra.mxu0 0.0
    %61 = vmatprep.subr.mxu0 0.0
    %62 = vmatpush1.msra.mxu0 0.0
    %63 = vmatprep.subr.mxu0 0.0
    %64 = vmatpush1.msra.mxu0 0.0
    %65 = vmatprep.subr.mxu0 0.0
    %66 = vmatpush1.msra.mxu0 0.0
    %67 = vmatprep.subr.mxu0 0.0
    %68 = vmatpush1.msra.mxu0 0.0
    %69 = vmatprep.subr.mxu0 0.0
    %70 = vmatpush1.msra.mxu0 0.0
    %71 = vmatprep.subr.mxu0 0.0
    %72 = vmatpush1.msra.mxu0 0.0
    %73 = vmatprep.subr.mxu0 0.0
    %74 = vmatpush1.msra.mxu0 0.0
    %75 = vmatprep.subr.mxu0 0.0
    %76 = vmatpush1.msra.mxu0 0.0
    %77 = vmatprep.subr.mxu0 0.0
    %78 = vmatpush1.msra.mxu0 0.0
    %79 = vmatprep.subr.mxu0 0.0
    %80 = vmatpush1.msra.mxu0 0.0
    %81 = vmatprep.subr.mxu0 0.0
    %82 = vmatpush1.msra.mxu0 0.0
    %83 = vmatprep.subr.mxu0 0.0
    %84 = vmatpush1.msra.mxu0 0.0
    %85 = vmatprep.subr.mxu0 0.0
    %86 = vmatpush1.msra.mxu0 0.0
    %87 = vmatprep.subr.mxu0 0.0
    %88 = vmatpush1.msra.mxu0 %v44
    %89 = vmatprep.subr.mxu0 0.0
    %90 = vmatpush1.msra.mxu0 %v43
    %91 = vmatprep.subr.mxu0 0.0
    %92 = vmatpush2.msra.mxu0 0.0
    %93 = vmatprep.subr.mxu0 0.0
    %94 = vmatpush2.msra.mxu0 0.0
    %95 = vmatprep.subr.mxu0 0.0
    %96 = vmatpush2.msra.mxu0 0.0
    %97 = vmatprep.subr.mxu0 0.0
    %98 = vmatpush2.msra.mxu0 0.0
    %99 = vmatprep.subr.mxu0 0.0
    %100 = vmatpush2.msra.mxu0 0.0
    %101 = vmatprep.subr.mxu0 0.0
    %102 = vmatpush2.msra.mxu0 0.0
    %103 = vmatprep.subr.mxu0 0.0
    %104 = vmatpush2.msra.mxu0 0.0
    %105 = vmatprep.subr.mxu0 0.0
    %106 = vmatpush2.msra.mxu0 0.0
    %107 = vmatprep.subr.mxu0 0.0
    %108 = vmatpush2.msra.mxu0 0.0
    %109 = vmatprep.subr.mxu0 0.0
    %110 = vmatpush2.msra.mxu0 0.0
    %111 = vmatprep.subr.mxu0 0.0
    %112 = vmatpush2.msra.mxu0 0.0
    %113 = vmatprep.subr.mxu0 0.0
    %114 = vmatpush2.msra.mxu0 0.0
    %115 = vmatprep.subr.mxu0 0.0
    %116 = vmatpush2.msra.mxu0 0.0
    %117 = vmatprep.subr.mxu0 0.0
    %118 = vmatpush2.msra.mxu0 0.0
    %119 = vmatprep.subr.mxu0 0.0
    %120 = vmatpush2.msra.mxu0 0.0
    %121 = vmatprep.subr.mxu0 0.0
    %122 = vmatpush2.msra.mxu0 0.0
    %123 = vmatprep.mubr.f32.mxu0 0.0
    %124 = vmatmul.mubr.f32.gmra.mxu0 %v54
    %v125 = vpop.f32.mrf.mxu0
    %v126 = vadd.f32 %v50, %v125
    %v127 = vpop.f32.mrf.mxu0
    %128 = vmatprep.mubr.f32.mxu0 0.0
    %129 = vmatmul.mubr.f32.gmra.mxu0 %v57
    %v130 = vpop.f32.mrf.mxu0
    %v131 = vadd.f32 %v50, %v130
    %v132 = vpop.f32.mrf.mxu0
    %133 = vdwg.mxu0
    %vm134 = vcmask 261120
    %135 = vst.msk [vmem:[#allocation5] sm:$0xff] %vm134, %v126
    %vm136 = vcmask 257024
    %137 = vst.msk [vmem:[#allocation5 + $0x8] sm:$0xf] %vm136, %v131
    %v138 = vld [vmem:[%s1] sm:$0xff]
    %v139 = vld [vmem:[%s1 + $0x8] sm:$0xff]
    %v140 = vld [vmem:[%s1 + $0x10] sm:$0xff]
    %v141 = vld [vmem:[%s4] sm:$0x3]
    %v142 = vld [vmem:[%s5] sm:$0x1]
    %v144 = vlaneseq
    %v145 = vshrl.u32 %v144, 7
    %v146 = vsub.s32 0, %v145
    %v147 = vrot.slane %v142, %v146
    %vm149 = vcmask 15360
    %v151 = vsel %vm149, %v138, 0
    %v154 = vsel %vm149, %v139, 0
    %v157 = vsel %vm149, %v140, 0
    %vm159 = vcmask 1041408
    %v161 = vsel %vm159, %v141, 0
    %163 = vmatprep.subr.mxu0 0.0
    %164 = vmatpush1.msra.mxu0 0.0
    %165 = vmatprep.subr.mxu0 0.0
    %166 = vmatpush1.msra.mxu0 0.0
    %167 = vmatprep.subr.mxu0 0.0
    %168 = vmatpush1.msra.mxu0 0.0
    %169 = vmatprep.subr.mxu0 0.0
    %170 = vmatpush1.msra.mxu0 0.0
    %171 = vmatprep.subr.mxu0 0.0
    %172 = vmatpush1.msra.mxu0 0.0
    %173 = vmatprep.subr.mxu0 0.0
    %174 = vmatpush1.msra.mxu0 0.0
    %175 = vmatprep.subr.mxu0 0.0
    %176 = vmatpush1.msra.mxu0 0.0
    %177 = vmatprep.subr.mxu0 0.0
    %178 = vmatpush1.msra.mxu0 0.0
    %179 = vmatprep.subr.mxu0 0.0
    %180 = vmatpush1.msra.mxu0 0.0
    %181 = vmatprep.subr.mxu0 0.0
    %182 = vmatpush1.msra.mxu0 0.0
    %183 = vmatprep.subr.mxu0 0.0
    %184 = vmatpush1.msra.mxu0 0.0
    %185 = vmatprep.subr.mxu0 0.0
    %186 = vmatpush1.msra.mxu0 0.0
    %187 = vmatprep.subr.mxu0 0.0
    %188 = vmatpush1.msra.mxu0 0.0
    %189 = vmatprep.subr.mxu0 0.0
    %190 = vmatpush1.msra.mxu0 0.0
    %191 = vmatprep.subr.mxu0 0.0
    %192 = vmatpush1.msra.mxu0 0.0
    %193 = vmatprep.subr.mxu0 0.0
    %194 = vmatpush1.msra.mxu0 %v161
    %195 = vmatprep.subr.mxu0 0.0
    %196 = vmatpush2.msra.mxu0 0.0
    %197 = vmatprep.subr.mxu0 0.0
    %198 = vmatpush2.msra.mxu0 0.0
    %199 = vmatprep.subr.mxu0 0.0
    %200 = vmatpush2.msra.mxu0 0.0
    %201 = vmatprep.subr.mxu0 0.0
    %202 = vmatpush2.msra.mxu0 0.0
    %203 = vmatprep.subr.mxu0 0.0
    %204 = vmatpush2.msra.mxu0 0.0
    %205 = vmatprep.subr.mxu0 0.0
    %206 = vmatpush2.msra.mxu0 0.0
    %207 = vmatprep.subr.mxu0 0.0
    %208 = vmatpush2.msra.mxu0 0.0
    %209 = vmatprep.subr.mxu0 0.0
    %210 = vmatpush2.msra.mxu0 0.0
    %211 = vmatprep.subr.mxu0 0.0
    %212 = vmatpush2.msra.mxu0 0.0
    %213 = vmatprep.subr.mxu0 0.0
    %214 = vmatpush2.msra.mxu0 0.0
    %215 = vmatprep.subr.mxu0 0.0
    %216 = vmatpush2.msra.mxu0 0.0
    %217 = vmatprep.subr.mxu0 0.0
    %218 = vmatpush2.msra.mxu0 0.0
    %219 = vmatprep.subr.mxu0 0.0
    %220 = vmatpush2.msra.mxu0 0.0
    %221 = vmatprep.subr.mxu0 0.0
    %222 = vmatpush2.msra.mxu0 0.0
    %223 = vmatprep.subr.mxu0 0.0
    %224 = vmatpush2.msra.mxu0 0.0
    %225 = vmatprep.subr.mxu0 0.0
    %226 = vmatpush2.msra.mxu0 0.0
    %227 = vmatprep.mubr.f32.mxu0 0.0
    %228 = vmatmul.mubr.f32.gmra.mxu0 %v151
    %v229 = vpop.f32.mrf.mxu0
    %v230 = vadd.f32 %v147, %v229
    %v231 = vpop.f32.mrf.mxu0
    %232 = vmatprep.mubr.f32.mxu0 0.0
    %233 = vmatmul.mubr.f32.gmra.mxu0 %v154
    %v234 = vpop.f32.mrf.mxu0
    %v235 = vadd.f32 %v147, %v234
    %v236 = vpop.f32.mrf.mxu0
    %237 = vmatprep.mubr.f32.mxu0 0.0
    %238 = vmatmul.mubr.f32.gmra.mxu0 %v157
    %v239 = vpop.f32.mrf.mxu0
    %v240 = vadd.f32 %v147, %v239
    %v241 = vpop.f32.mrf.mxu0
    %242 = vdwg.mxu0
    %243 = vst.msk [vmem:[#allocation6] sm:$0xff] %vm134, %v230
    %244 = vst.msk [vmem:[#allocation6 + $0x8] sm:$0xff] %vm134, %v235
    %245 = vst.msk [vmem:[#allocation6 + $0x10] sm:$0xff] %vm134, %v240
    // Predicated region
    $region30: #{tpu_custom_call.1} parent=1 // pred_check
      _
    $region31: #{tpu_custom_call.1} parent=1 // pred_check_branch
      %247 = sbr.rel (0) target = $region33
    $region32: #{tpu_custom_call.1} parent=1 // pred_region
      %s249 = ssub.s32 256, 256
      %250 = vsyncadd [#allocation4], %s249
      %s251 = sshll.u32 [#allocation5], 4
      %s252 = int_to_ptr.vmem [resolvable:$true] %s251
      %257 = dma.vmem_to_hbm [thread:$0]  %s252, 256, %s6, [#allocation4], 128, 128, 8
    $region33: #{tpu_custom_call.1} parent=1 // pred_fallthru
      _
    // Predicated region
    $region34: #{tpu_custom_call.1} parent=1 // pred_check
      _
    $region35: #{tpu_custom_call.1} parent=1 // pred_check_branch
      %259 = sbr.rel (0) target = $region37
    $region36: #{tpu_custom_call.1} parent=1 // pred_region
      %s261 = ssub.s32 384, 384
      %262 = vsyncadd [#allocation7], %s261
      %s263 = sshll.u32 [#allocation6], 4
      %s264 = int_to_ptr.vmem [resolvable:$true] %s263
      %269 = dma.vmem_to_hbm [thread:$0]  %s264, 384, %s7, [#allocation7], 128, 128, 8
    $region37: #{tpu_custom_call.1} parent=1 // pred_fallthru
      _
    // Predicated region
    $region38: #{tpu_custom_call.1} parent=1 // pred_check
      _
    $region39: #{tpu_custom_call.1} parent=1 // pred_check_branch
      %271 = sbr.rel (0) target = $region41
    $region40: #{tpu_custom_call.1} parent=1 // pred_region
      %272 = dma.done [#allocation4], 256
    $region41: #{tpu_custom_call.1} parent=1 // pred_fallthru
      _
    // Predicated region
    $region42: #{tpu_custom_call.1} parent=1 // pred_check
      _
    $region43: #{tpu_custom_call.1} parent=1 // pred_check_branch
      %274 = sbr.rel (0) target = $region45
    $region44: #{tpu_custom_call.1} parent=1 // pred_region
      %275 = dma.done [#allocation7], 384
    $region45: #{tpu_custom_call.1} parent=1 // pred_fallthru
      _
    %276 = vsyncpa [#allocation3], 1
    %277 = vsyncpa [#allocation4], 1
    %278 = vsyncpa [#allocation7], 1

</llo_original>
